<compile_context>
chip_gen: v7x
topology: tpu7x:2x2x1
jax: 0.10.0
libtpu: 0.0.40
codegen_flags: <defaults>
</compile_context>

<pallas_src>
import jax
import jax.numpy as jnp
from jax.experimental import pallas as pl
from jax.experimental.pallas import tpu as pltpu


def _conv1x1_kernel(x_ref, w_ref, b_ref, o_ref):
    """One lane tile of a 1x1 conv, covering the whole batch.

    x_ref : (N, C, TL) VMEM  -- channels on sublanes, H*W pixels on lanes
    w_ref : (C, O)     VMEM  -- full conv weight (transposed PyTorch layout)
    b_ref : (O,)       SMEM  -- bias scalars
    o_ref : (N*O, TL)  VMEM  -- lane-dense output, row index = n*O + o
    """
    x = x_ref[...]                      # load once, reuse for every (n, o)
    n_img = x_ref.shape[0]
    n_out = w_ref.shape[1]

    rows = []
    for ni in range(n_img):             # static unroll: N is small
        x_n = x[ni]                     # (C, TL)
        if n_out >= 8:
            # Wide decoder: channel reduction on the MXU (w.T @ x_n).
            y_n = pl.dot(w_ref[...], x_n, trans_a=True)            # (O, TL) f32
            for oi in range(n_out):
                rows.append(y_n[oi:oi + 1, :] + b_ref[oi])
        else:
            # Narrow decoder (SAMDecoder: O=1): VPU multiply + cross-sublane
            # reduce; keeps the near-empty MXU pass off the critical path.
            for oi in range(n_out):
                w_col = w_ref[:, oi:oi + 1]                        # (C, 1)
                y = jnp.sum(w_col * x_n, axis=0, keepdims=True)    # (1, TL) f32
                rows.append(y + b_ref[oi])

    # Accumulate the whole (N*O, TL) tile and do ONE unmasked lane-dense store
    # instead of per-row (1-sublane, masked) stores.
    o_ref[...] = jnp.concatenate(rows, axis=0).astype(o_ref.dtype)


def sam_decoder_forward(x_nchw, weight, bias, *, vmem_budget_bytes=8 << 20):
    """1x1 Conv2d forward (SAMDecoder.forward).

    x_nchw : (N, C, H, W) float32
    weight : (O, C, 1, 1)  PyTorch Conv2d weight layout
    bias   : (O,)
    returns: (N, O, H, W) float32
    """
    N, C, H, W = x_nchw.shape
    O = weight.shape[0]
    HW = H * W

    # Free reshapes only — no NCHW<->NHWC transposes.  (The tiny weight
    # transpose is a negligible one-off; under jit it fuses/hoists.)
    x3d = x_nchw.reshape(N, C, HW)          # (N, C, HW)
    w2d = weight.reshape(O, C).T            # (C, O)
    b1d = bias.reshape(O)

    # Lane tile: cover the full image if it fits the VMEM budget, else tile
    # H*W only.  Budget accounts for the double-buffered pipeline:
    #   bytes/lane ≈ 2*(N*C*4) + 2*(N*O*4)
    # 8 MiB stays below every generation's scoped-VMEM default (16 MiB v5e,
    # 32 MiB v6e/v7x) with headroom, so no vmem_limit_bytes override needed.
    bytes_per_lane = 2 * (N * C * 4) + 2 * (N * O * 4)
    tl_cap = max(512, (vmem_budget_bytes // bytes_per_lane) // 128 * 128)
    tl = HW if HW <= tl_cap else tl_cap
    n_hw = pl.cdiv(HW, tl)                  # 1 step for the toy/typical shapes

    out2d = pl.pallas_call(
        _conv1x1_kernel,
        out_shape=jax.ShapeDtypeStruct((N * O, HW), x_nchw.dtype),
        grid=(n_hw,),
        in_specs=[
            pl.BlockSpec((N, C, tl), lambda t: (0, 0, t)),          # whole-batch tile
            pl.BlockSpec((C, O), lambda t: (0, 0)),                 # full weight
            pl.BlockSpec(memory_space=pltpu.MemorySpace.SMEM),      # bias scalars
        ],
        out_specs=pl.BlockSpec((N * O, tl), lambda t: (0, t)),      # lane-dense out
        # Stateless across tiles -> always "parallel" (lets v7x shard the grid
        # across its two TensorCores; no-op on single-TC v5e/v6e).
        compiler_params=pltpu.CompilerParams(dimension_semantics=("parallel",)),
    )(x3d, w2d, b1d)

    return out2d.reshape(N, O, H, W)


if __name__ == "__main__":
    # Small shapes consistent with the module's forward:
    # SAMDecoder(input_dim=32, output_channels=1), x = (2, 32, 16, 16)
    N, C, H, W, O = 2, 32, 16, 16, 1

    key = jax.random.PRNGKey(0)
    kx, kw, kb = jax.random.split(key, 3)

    x = jax.random.normal(kx, (N, C, H, W), dtype=jnp.float32)
    weight = jax.random.normal(kw, (O, C, 1, 1), dtype=jnp.float32) * (1.0 / C) ** 0.5
    bias = jax.random.normal(kb, (O,), dtype=jnp.float32) * 0.1

    y = sam_decoder_forward(x, weight, bias)
    y = jax.block_until_ready(y)

    # Pure-JAX reference of the same 1x1 conv.
    ref = jnp.einsum("nchw,oc->nohw", x, weight.reshape(O, C)) + bias.reshape(1, O, 1, 1)
    assert y.shape == (N, O, H, W)
    assert jnp.allclose(y, ref, atol=1e-5, rtol=1e-5)

    print("KERNEL_OK")
</pallas_src>

<mosaic_0001>
module attributes {stable_mosaic.version = 11 : i64} {
  func.func @_conv1x1_kernel(%arg0: i32, %arg1: memref<2x32x256xf32, #tpu.memory_space<vmem>>, %arg2: memref<32x1xf32, #tpu.memory_space<vmem>>, %arg3: memref<1xf32, #tpu.memory_space<smem>>, %arg4: memref<2x256xf32, #tpu.memory_space<vmem>>) attributes {dimension_semantics = [#tpu.dimension_semantics<parallel>], iteration_bounds = array<i64: 1>, scalar_prefetch = 0 : i64, scratch_operands = 0 : i64, tpu.core_type = #tpu.core_type<tc>, window_params = [{transform_indices = @transform_0, window_bounds = array<i64: 2, 32, 256>}, {pipeline_mode = #tpu.pipeline_mode<synchronous>, transform_indices = @transform_1, window_bounds = array<i64: 32, 1>}, {transform_indices = @transform_2, window_bounds = array<i64: 1>}, {transform_indices = @transform_3, window_bounds = array<i64: 2, 256>}]} {
    %c0 = arith.constant 0 : index
    %c0_0 = arith.constant 0 : index
    %c0_1 = arith.constant 0 : index
    %0 = vector.load %arg1[%c0, %c0_0, %c0_1] : memref<2x32x256xf32, #tpu.memory_space<vmem>>, vector<2x32x256xf32>
    %1 = vector.extract_strided_slice %0 {offsets = [0, 0, 0], sizes = [1, 32, 256], strides = [1, 1, 1]} : vector<2x32x256xf32> to vector<1x32x256xf32>
    %2 = vector.shape_cast %1 : vector<1x32x256xf32> to vector<32x256xf32>
    %c0_2 = arith.constant 0 : index
    %c0_3 = arith.constant 0 : index
    %3 = vector.load %arg2[%c0_2, %c0_3] : memref<32x1xf32, #tpu.memory_space<vmem>>, vector<32x1xf32>
    %4 = vector.broadcast %3 : vector<32x1xf32> to vector<32x256xf32>
    %5 = arith.mulf %4, %2 : vector<32x256xf32>
    %cst = arith.constant dense<0.000000e+00> : vector<256xf32>
    %6 = vector.multi_reduction <add>, %5, %cst [0] : vector<32x256xf32> to vector<256xf32>
    %7 = vector.shape_cast %6 : vector<256xf32> to vector<1x256xf32>
    %c0_4 = arith.constant 0 : index
    %8 = memref.load %arg3[%c0_4] : memref<1xf32, #tpu.memory_space<smem>>
    %9 = vector.broadcast %8 : f32 to vector<1x256xf32>
    %10 = arith.addf %7, %9 : vector<1x256xf32>
    %11 = vector.extract_strided_slice %0 {offsets = [1, 0, 0], sizes = [1, 32, 256], strides = [1, 1, 1]} : vector<2x32x256xf32> to vector<1x32x256xf32>
    %12 = vector.shape_cast %11 : vector<1x32x256xf32> to vector<32x256xf32>
    %c0_5 = arith.constant 0 : index
    %c0_6 = arith.constant 0 : index
    %13 = vector.load %arg2[%c0_5, %c0_6] : memref<32x1xf32, #tpu.memory_space<vmem>>, vector<32x1xf32>
    %14 = vector.broadcast %13 : vector<32x1xf32> to vector<32x256xf32>
    %15 = arith.mulf %14, %12 : vector<32x256xf32>
    %cst_7 = arith.constant dense<0.000000e+00> : vector<256xf32>
    %16 = vector.multi_reduction <add>, %15, %cst_7 [0] : vector<32x256xf32> to vector<256xf32>
    %17 = vector.shape_cast %16 : vector<256xf32> to vector<1x256xf32>
    %c0_8 = arith.constant 0 : index
    %18 = memref.load %arg3[%c0_8] : memref<1xf32, #tpu.memory_space<smem>>
    %19 = vector.broadcast %18 : f32 to vector<1x256xf32>
    %20 = arith.addf %17, %19 : vector<1x256xf32>
    %21 = tpu.concatenate %10, %20 in 0 : vector<1x256xf32>, vector<1x256xf32> -> vector<2x256xf32>
    %c0_9 = arith.constant 0 : index
    %c0_10 = arith.constant 0 : index
    %22 = vector.load %arg4[%c0_9, %c0_10] : memref<2x256xf32, #tpu.memory_space<vmem>>, vector<2x256xf32>
    tpu.vector_store %arg4[%c0_9, %c0_10], %21 {strides = array<i32>} : memref<2x256xf32, #tpu.memory_space<vmem>>, vector<2x256xf32>,
    return
  }
  func.func @transform_0(%arg0: i32) -> (i32, i32, i32) {
    %c0_i32 = arith.constant 0 : i32
    %c0_i32_0 = arith.constant 0 : i32
    %c0_i32_1 = arith.constant 0 : i32
    return %c0_i32, %c0_i32_0, %arg0 : i32, i32, i32
  }
  func.func @transform_1(%arg0: i32) -> (i32, i32) {
    %c0_i32 = arith.constant 0 : i32
    %c0_i32_0 = arith.constant 0 : i32
    %c0_i32_1 = arith.constant 0 : i32
    return %c0_i32, %c0_i32_0 : i32, i32
  }
  func.func @transform_2(%arg0: i32) -> i32 {
    %c0_i32 = arith.constant 0 : i32
    %c0_i32_0 = arith.constant 0 : i32
    return %c0_i32 : i32
  }
  func.func @transform_3(%arg0: i32) -> (i32, i32) {
    %c0_i32 = arith.constant 0 : i32
    %c0_i32_0 = arith.constant 0 : i32
    return %c0_i32, %arg0 : i32, i32
  }
}

</mosaic_0001>

<llo_original>
// kernel: tpu_custom_call.1
$region0: #{tpu_custom_call.1}
  #allocation0 [shape = 'u32[]', space=smem, size = 0x4, offset = 0x4, fixed_abs, tag = 'smem constant byte address 0x4 - core index']
  #allocation1 [shape = 'u32[144,128]{1,0:T(1,128)}', space=vmem, size = 0x12000, scoped, tag = 'internal scratch']
  #allocation2 [shape = 'f32[1]{0:T(128)S(6)}', space=smem, size = 0x200, scoped, tag = 'scoped memory for tpu_custom_call.1']
  %s0 = inlined_call_operand.hbm [shape: f32[2,32,256], index: 0, kind: input, shape index: {}]
  %s1 = inlined_call_operand.vmem [shape: f32[32,1], index: 1, kind: input, shape index: {}]
  %s2 = inlined_call_operand.<no memory space> [shape: f32[1], index: 2, kind: input, shape index: {}]
  %s3 = inlined_call_operand.hbm [shape: f32[2,256], index: 3, kind: output, shape index: {}]
  %s4 = sld [smem:[#allocation0]]
  $region26: #{tpu_custom_call.1} parent=0
    _
  %s6 = ssub.s32 1, %s4
  %s7 = scalar_select 0, %s6, %s4
  %8 = sst [smem:[#allocation2]] %s2
  $region1: #{tpu_custom_call.1} parent=0
    #allocation3 [shape = 'u8[65536]{0}', space=vmem, size = 0x10000, scoped, tag = 'input window, operand 0, single buffered']
    #allocation4 [shape = 's32[1]{0}', space=sflag, size = 0x4, scoped, tag = 'scoped memory for tpu_custom_call.1']
    #allocation5 [shape = 's32[1]{0}', space=sflag, size = 0x4, scoped, tag = 'scoped memory for tpu_custom_call.1']
    #allocation6 [shape = 'u8[2048]{0}', space=vmem, size = 0x800, scoped, tag = 'output window, operand 0, single buffered']
    %9 = vsyncpa [#allocation4], 0
    %10 = vsyncpa [#allocation5], 0
    // Predicated region
    $region2: #{tpu_custom_call.1} parent=1 // pred_check
      _
    $region3: #{tpu_custom_call.1} parent=1 // pred_check_branch
      %12 = sbr.rel (0) target = $region5
    $region4: #{tpu_custom_call.1} parent=1 // pred_region
      %s14 = ssub.s32 2048, 2048
      %15 = vsyncadd [#allocation4], %s14
      %s16 = sshll.u32 [#allocation3], 4
      %s17 = int_to_ptr.vmem [resolvable:$true] %s16
      %22 = dma.hbm_to_vmem [thread:$0]  %s0, 2048, %s17, [#allocation4], 256, 256, 16
    $region5: #{tpu_custom_call.1} parent=1 // pred_fallthru
      _
    // Predicated region
    $region6: #{tpu_custom_call.1} parent=1 // pred_check
      _
    $region7: #{tpu_custom_call.1} parent=1 // pred_check_branch
      %24 = sbr.rel (0) target = $region9
    $region8: #{tpu_custom_call.1} parent=1 // pred_region
      _
    $region9: #{tpu_custom_call.1} parent=1 // pred_fallthru
      _
    // Predicated region
    $region10: #{tpu_custom_call.1} parent=1 // pred_check
      _
    $region11: #{tpu_custom_call.1} parent=1 // pred_check_branch
      %26 = sbr.rel (0) target = $region13
    $region12: #{tpu_custom_call.1} parent=1 // pred_region
      _
    $region13: #{tpu_custom_call.1} parent=1 // pred_fallthru
      _
    // Predicated region
    $region14: #{tpu_custom_call.1} parent=1 // pred_check
      _
    $region15: #{tpu_custom_call.1} parent=1 // pred_check_branch
      %28 = sbr.rel (0) target = $region17
    $region16: #{tpu_custom_call.1} parent=1 // pred_region
      %29 = dma.done [#allocation4], 2048
    $region17: #{tpu_custom_call.1} parent=1 // pred_fallthru
      _
    %v30 = vld [vmem:[#allocation3] sm:$0xff]
    %v31 = vld [vmem:[#allocation3 + $0x8] sm:$0xff]
    %v32 = vld [vmem:[#allocation3 + $0x10] sm:$0xff]
    %v33 = vld [vmem:[#allocation3 + $0x18] sm:$0xff]
    %v34 = vld [vmem:[#allocation3 + $0x20] sm:$0xff]
    %v35 = vld [vmem:[#allocation3 + $0x28] sm:$0xff]
    %v36 = vld [vmem:[#allocation3 + $0x30] sm:$0xff]
    %v37 = vld [vmem:[#allocation3 + $0x38] sm:$0xff]
    %v38 = vld [vmem:[#allocation3 + $0x40] sm:$0xff]
    %v39 = vld [vmem:[#allocation3 + $0x48] sm:$0xff]
    %v40 = vld [vmem:[#allocation3 + $0x50] sm:$0xff]
    %v41 = vld [vmem:[#allocation3 + $0x58] sm:$0xff]
    %v42 = vld [vmem:[#allocation3 + $0x60] sm:$0xff]
    %v43 = vld [vmem:[#allocation3 + $0x68] sm:$0xff]
    %v44 = vld [vmem:[#allocation3 + $0x70] sm:$0xff]
    %v45 = vld [vmem:[#allocation3 + $0x78] sm:$0xff]
    %v46 = vld [vmem:[%s1] sm:$0xff]
    %v47 = vld [vmem:[%s1 + $0x8] sm:$0xff]
    %v48 = vld [vmem:[%s1 + $0x10] sm:$0xff]
    %v49 = vld [vmem:[%s1 + $0x18] sm:$0xff]
    %51 = vset.pattern.permute.xlu0 0
    %52 = vperm.xlu0 %51, %v46
    %v53 = vpop.permute.xlu0 %52
    %56 = vset.pattern.permute.xlu0 0
    %57 = vperm.xlu0 %56, %v47
    %v58 = vpop.permute.xlu0 %57
    %61 = vset.pattern.permute.xlu0 0
    %62 = vperm.xlu0 %61, %v48
    %v63 = vpop.permute.xlu0 %62
    %66 = vset.pattern.permute.xlu0 0
    %67 = vperm.xlu0 %66, %v49
    %v68 = vpop.permute.xlu0 %67
    %v70 = vmul.f32 %v53, %v30
    %v71 = vmul.f32 %v53, %v31
    %v72 = vmul.f32 %v58, %v32
    %v73 = vmul.f32 %v58, %v33
    %v74 = vmul.f32 %v63, %v34
    %v75 = vmul.f32 %v63, %v35
    %v76 = vmul.f32 %v68, %v36
    %v77 = vmul.f32 %v68, %v37
    %v78 = vadd.f32 %v70, %v72
    %v79 = vadd.f32 %v78, %v74
    %v80 = vadd.f32 %v79, %v76
    %v81 = vrot.slane %v80, 4
    %v82 = vadd.f32 %v80, %v81
    %v83 = vrot.slane %v82, 2
    %v84 = vadd.f32 %v82, %v83
    %v85 = vrot.slane %v84, 1
    %v86 = vadd.f32 %v84, %v85
    %v87 = vadd.f32 %v71, %v73
    %v88 = vadd.f32 %v87, %v75
    %v89 = vadd.f32 %v88, %v77
    %v90 = vrot.slane %v89, 4
    %v91 = vadd.f32 %v89, %v90
    %v92 = vrot.slane %v91, 2
    %v93 = vadd.f32 %v91, %v92
    %v94 = vrot.slane %v93, 1
    %v95 = vadd.f32 %v93, %v94
    %s96 = sld [smem:[#allocation2]]
    %v97 = vstv %s96
    %v98 = vadd.f32 %v86, %v97
    %v99 = vadd.f32 %v95, %v97
    %v100 = vmul.f32 %v53, %v38
    %v101 = vmul.f32 %v53, %v39
    %v102 = vmul.f32 %v58, %v40
    %v103 = vmul.f32 %v58, %v41
    %v104 = vmul.f32 %v63, %v42
    %v105 = vmul.f32 %v63, %v43
    %v106 = vmul.f32 %v68, %v44
    %v107 = vmul.f32 %v68, %v45
    %v108 = vadd.f32 %v100, %v102
    %v109 = vadd.f32 %v108, %v104
    %v110 = vadd.f32 %v109, %v106
    %v111 = vrot.slane %v110, 4
    %v112 = vadd.f32 %v110, %v111
    %v113 = vrot.slane %v112, 2
    %v114 = vadd.f32 %v112, %v113
    %v115 = vrot.slane %v114, 1
    %v116 = vadd.f32 %v114, %v115
    %v117 = vadd.f32 %v101, %v103
    %v118 = vadd.f32 %v117, %v105
    %v119 = vadd.f32 %v118, %v107
    %v120 = vrot.slane %v119, 4
    %v121 = vadd.f32 %v119, %v120
    %v122 = vrot.slane %v121, 2
    %v123 = vadd.f32 %v121, %v122
    %v124 = vrot.slane %v123, 1
    %v125 = vadd.f32 %v123, %v124
    %v126 = vadd.f32 %v116, %v97
    %v127 = vadd.f32 %v125, %v97
    %vm128 = vcmask 1040384
    %v129 = vsel %vm128, %v98, %v126
    %v130 = vsel %vm128, %v99, %v127
    %v133 = vcombine.low %v129, %v130
    %v135 = vunpack.c.l.s4 1983009808
    %v136 = vunpack.c.0.s8 %v135
    %v137 = vlaneseq
    %v138 = vshrl.u32 %v137, 7
    %v139 = vsub.s32 %v136, %v138
    %v140 = vrot.slane %v133, %v139
    %142 = vst [vmem:[#allocation6] sm:$0xf] %v140
    // Predicated region
    $region18: #{tpu_custom_call.1} parent=1 // pred_check
      _
    $region19: #{tpu_custom_call.1} parent=1 // pred_check_branch
      %144 = sbr.rel (0) target = $region21
    $region20: #{tpu_custom_call.1} parent=1 // pred_region
      %s146 = ssub.s32 64, 64
      %147 = vsyncadd [#allocation5], %s146
      %s149 = sshll.u32 [#allocation6], 4
      %s150 = int_to_ptr.vmem [resolvable:$true] %s149
      %152 = dma.vmem_to_hbm [thread:$0]  %s150, 64, %s3, [#allocation5]
    $region21: #{tpu_custom_call.1} parent=1 // pred_fallthru
      _
    // Predicated region
    $region22: #{tpu_custom_call.1} parent=1 // pred_check
      _
    $region23: #{tpu_custom_call.1} parent=1 // pred_check_branch
      %154 = sbr.rel (0) target = $region25
    $region24: #{tpu_custom_call.1} parent=1 // pred_region
      %155 = dma.done [#allocation5], 64
    $region25: #{tpu_custom_call.1} parent=1 // pred_fallthru
      _
    %156 = vsyncpa [#allocation4], 1
    %157 = vsyncpa [#allocation5], 1

</llo_original>
